<compile_context>
chip_gen: v5e
topology: v5e:2x2
jax: 0.10.0
libtpu: 0.0.40
codegen_flags: <defaults>
</compile_context>

<pallas_src>
import jax
import jax.numpy as jnp
from jax.experimental import pallas as pl
from jax.experimental.pallas import tpu as pltpu

LOG_STD_MAX = 2.0
LOG_STD_MIN = -20.0

_SUBLANE = 8              # vreg sublane height (batch-tile alignment)
_MAX_BATCH_TILE = 4096    # per-tile VMEM is tiny even here; amortizes step overhead
_MIN_SPLIT_BATCH = 1024   # above this, force >=2 tiles so v7x's 2nd TC isn't idle


def _round_up(x, m):
    return ((x + m - 1) // m) * m


def gaussian_policy_kernel(
    obs_ref,   # [TB, S]   streamed batch tile of observations
    w1_ref,    # [S,  H]   resident
    b1_ref,    # [1,  H]   resident
    w2_ref,    # [H,  H]   resident
    b2_ref,    # [1,  H]   resident
    w3_ref,    # [H,  A]   resident
    b3_ref,    # [1,  A]   resident
    mean_ref,  # [TB, A]   out
):
    # Layer 1: Linear + ReLU  (f32 accumulation on the MXU)
    h = jnp.dot(obs_ref[...], w1_ref[...], preferred_element_type=jnp.float32)
    h = jnp.maximum(h + b1_ref[...], 0.0)

    # Layer 2: Linear + ReLU
    h = jnp.dot(h, w2_ref[...], preferred_element_type=jnp.float32)
    h = jnp.maximum(h + b2_ref[...], 0.0)

    # Output layer: Linear + Tanh
    mean = jnp.dot(h, w3_ref[...], preferred_element_type=jnp.float32) + b3_ref[...]
    mean_ref[...] = jnp.tanh(mean).astype(mean_ref.dtype)


def _choose_batch_tile(batch):
    """Pick a sublane-aligned batch tile: large, low-waste, and >=2 tiles for
    big batches so the grid can shard across TensorCores on v7x."""
    n_tiles = pl.cdiv(batch, _MAX_BATCH_TILE)
    if batch >= _MIN_SPLIT_BATCH:
        n_tiles = max(n_tiles, 2)
    if n_tiles == 1:
        # Single tile: block dim equals the full array dim (always legal),
        # no padding, no masking.
        return batch
    return _round_up(pl.cdiv(batch, n_tiles), _SUBLANE)


def gaussian_policy_forward(obs, params):
    """Returns (mean, std) of the Normal distribution produced by GaussianPolicy.

    mean: [batch, act_dim]   std: [batch, act_dim] (broadcast of exp(clamp(log_std)))
    """
    w1, b1, w2, b2, w3, b3, log_std = (
        params["w1"], params["b1"], params["w2"], params["b2"],
        params["w3"], params["b3"], params["log_std"],
    )
    batch, state_dim = obs.shape
    hidden_dim = w1.shape[1]
    act_dim = w3.shape[1]

    tb = _choose_batch_tile(batch)
    grid = (pl.cdiv(batch, tb),)

    # Weights/biases: full-array blocks, constant index_map -> VMEM-resident
    # across all grid steps (Pallas skips the re-DMA after step 0).
    def _resident(shape):
        return pl.BlockSpec(shape, lambda i: (0, 0))

    in_specs = [
        pl.BlockSpec((tb, state_dim), lambda i: (i, 0)),   # obs batch tile (streamed)
        _resident((state_dim, hidden_dim)),                # w1
        _resident((1, hidden_dim)),                        # b1
        _resident((hidden_dim, hidden_dim)),               # w2
        _resident((1, hidden_dim)),                        # b2
        _resident((hidden_dim, act_dim)),                  # w3
        _resident((1, act_dim)),                           # b3
    ]
    out_spec = pl.BlockSpec((tb, act_dim), lambda i: (i, 0))

    # VMEM budget: double-buffered obs/mean tiles + (double-buffered) resident
    # weights + headroom, capped at 48 MiB (<= v7x's 64 MiB physical VMEM).
    tile_bytes = 2 * (tb * state_dim * 4) + 2 * (tb * act_dim * 4)
    weight_bytes = 4 * (
        state_dim * hidden_dim + hidden_dim
        + hidden_dim * hidden_dim + hidden_dim
        + hidden_dim * act_dim + act_dim
    )
    vmem_limit = int(min(48 * 1024 * 1024, tile_bytes + 2 * weight_bytes + (8 << 20)))

    mean = pl.pallas_call(
        gaussian_policy_kernel,
        out_shape=jax.ShapeDtypeStruct((batch, act_dim), jnp.float32),
        grid=grid,
        in_specs=in_specs,
        out_specs=out_spec,
        compiler_params=pltpu.CompilerParams(
            dimension_semantics=("parallel",),   # shard batch tiles across TCs (v7x)
            vmem_limit_bytes=vmem_limit,
        ),
    )(obs, w1, b1, w2, b2, w3, b3)

    # std is batch-independent -> compute once in the wrapper (no [B, A] HBM
    # writeback from the kernel); broadcast lazily to match Normal(mean, std).
    std = jnp.broadcast_to(
        jnp.exp(jnp.clip(log_std, LOG_STD_MIN, LOG_STD_MAX)), (batch, act_dim)
    )
    return mean, std


def init_params(key, state_dim, act_dim, hidden_dim):
    """Deterministic synthetic parameter init (matches module __init__ shapes).

    Weights are stored as [in_features, out_features] so the kernel computes
    y = x @ W + b (PyTorch's x @ W.T + b with W kept transposed).
    """
    ks = jax.random.split(key, 6)
    scale1 = 1.0 / jnp.sqrt(state_dim)
    scale2 = 1.0 / jnp.sqrt(hidden_dim)
    return {
        "w1": jax.random.uniform(ks[0], (state_dim, hidden_dim), jnp.float32, -scale1, scale1),
        "b1": jax.random.uniform(ks[1], (1, hidden_dim), jnp.float32, -scale1, scale1),
        "w2": jax.random.uniform(ks[2], (hidden_dim, hidden_dim), jnp.float32, -scale2, scale2),
        "b2": jax.random.uniform(ks[3], (1, hidden_dim), jnp.float32, -scale2, scale2),
        "w3": jax.random.uniform(ks[4], (hidden_dim, act_dim), jnp.float32, -scale2, scale2),
        "b3": jax.random.uniform(ks[5], (1, act_dim), jnp.float32, -scale2, scale2),
        # nn.Parameter(torch.zeros(act_dim)) -> zeros
        "log_std": jnp.zeros((1, act_dim), jnp.float32),
    }


def _reference(obs, params):
    h = jnp.maximum(obs @ params["w1"] + params["b1"], 0.0)
    h = jnp.maximum(h @ params["w2"] + params["b2"], 0.0)
    mean = jnp.tanh(h @ params["w3"] + params["b3"])
    std = jnp.broadcast_to(
        jnp.exp(jnp.clip(params["log_std"], LOG_STD_MIN, LOG_STD_MAX)),
        (obs.shape[0], params["w3"].shape[1]),
    )
    return mean, std


if __name__ == "__main__":
    # Small shapes consistent with the module: obs dim, action dim, hidden MLP.
    state_dim, act_dim, hidden_dim = 16, 8, 32

    key = jax.random.PRNGKey(0)
    k_obs, k_params, k_obs2 = jax.random.split(key, 3)
    params = init_params(k_params, state_dim, act_dim, hidden_dim)

    # 1) tiny batch (single full-array tile, no padding/masking)
    obs = jax.random.normal(k_obs, (2, state_dim), jnp.float32)
    mean, std = gaussian_policy_forward(obs, params)
    jax.block_until_ready((mean, std))
    mean_ref, std_ref = _reference(obs, params)
    assert mean.shape == (2, act_dim) and std.shape == (2, act_dim)
    assert jnp.allclose(mean, mean_ref, atol=1e-5), "mean mismatch (small batch)"
    assert jnp.allclose(std, std_ref, atol=1e-6), "std mismatch (small batch)"

    # 2) multi-tile batch (exercises >=2-tile grid + ragged last block masking)
    obs2 = jax.random.normal(k_obs2, (2500, state_dim), jnp.float32)
    mean2, std2 = gaussian_policy_forward(obs2, params)
    jax.block_until_ready((mean2, std2))
    mean2_ref, std2_ref = _reference(obs2, params)
    assert mean2.shape == (2500, act_dim)
    assert jnp.allclose(mean2, mean2_ref, atol=1e-5), "mean mismatch (tiled batch)"
    assert jnp.allclose(std2, std2_ref, atol=1e-6), "std mismatch (tiled batch)"

    print("KERNEL_OK")
</pallas_src>

<mosaic_0001>
module attributes {stable_mosaic.version = 11 : i64} {
  func.func @gaussian_policy_kernel(%arg0: i32, %arg1: memref<2x16xf32, #tpu.memory_space<vmem>>, %arg2: memref<16x32xf32, #tpu.memory_space<vmem>>, %arg3: memref<1x32xf32, #tpu.memory_space<vmem>>, %arg4: memref<32x32xf32, #tpu.memory_space<vmem>>, %arg5: memref<1x32xf32, #tpu.memory_space<vmem>>, %arg6: memref<32x8xf32, #tpu.memory_space<vmem>>, %arg7: memref<1x8xf32, #tpu.memory_space<vmem>>, %arg8: memref<2x8xf32, #tpu.memory_space<vmem>>) attributes {dimension_semantics = [#tpu.dimension_semantics<parallel>], iteration_bounds = array<i64: 1>, scalar_prefetch = 0 : i64, scratch_operands = 0 : i64, tpu.core_type = #tpu.core_type<tc>, window_params = [{transform_indices = @transform_0, window_bounds = array<i64: 2, 16>}, {pipeline_mode = #tpu.pipeline_mode<synchronous>, transform_indices = @transform_1, window_bounds = array<i64: 16, 32>}, {pipeline_mode = #tpu.pipeline_mode<synchronous>, transform_indices = @transform_2, window_bounds = array<i64: 1, 32>}, {pipeline_mode = #tpu.pipeline_mode<synchronous>, transform_indices = @transform_3, window_bounds = array<i64: 32, 32>}, {pipeline_mode = #tpu.pipeline_mode<synchronous>, transform_indices = @transform_4, window_bounds = array<i64: 1, 32>}, {pipeline_mode = #tpu.pipeline_mode<synchronous>, transform_indices = @transform_5, window_bounds = array<i64: 32, 8>}, {pipeline_mode = #tpu.pipeline_mode<synchronous>, transform_indices = @transform_6, window_bounds = array<i64: 1, 8>}, {transform_indices = @transform_7, window_bounds = array<i64: 2, 8>}]} {
    %c0 = arith.constant 0 : index
    %c0_0 = arith.constant 0 : index
    %0 = vector.load %arg1[%c0, %c0_0] : memref<2x16xf32, #tpu.memory_space<vmem>>, vector<2x16xf32>
    %c0_1 = arith.constant 0 : index
    %c0_2 = arith.constant 0 : index
    %1 = vector.load %arg2[%c0_1, %c0_2] : memref<16x32xf32, #tpu.memory_space<vmem>>, vector<16x32xf32>
    %cst = arith.constant dense<0.000000e+00> : vector<2x32xf32>
    %2 = tpu.matmul %0, %1, %cst {dimension_numbers = #tpu.dot_dimension_numbers<[1], [0], [0], [1], [0, 0, 1, 1], [], []>} : vector<2x16xf32>, vector<16x32xf32>, vector<2x32xf32> -> vector<2x32xf32>
    %c0_3 = arith.constant 0 : index
    %c0_4 = arith.constant 0 : index
    %3 = vector.load %arg3[%c0_3, %c0_4] : memref<1x32xf32, #tpu.memory_space<vmem>>, vector<1x32xf32>
    %4 = vector.broadcast %3 : vector<1x32xf32> to vector<2x32xf32>
    %5 = arith.addf %2, %4 : vector<2x32xf32>
    %cst_5 = arith.constant 0.000000e+00 : f32
    %6 = vector.broadcast %cst_5 : f32 to vector<2x32xf32>
    %7 = arith.maximumf %5, %6 : vector<2x32xf32>
    %c0_6 = arith.constant 0 : index
    %c0_7 = arith.constant 0 : index
    %8 = vector.load %arg4[%c0_6, %c0_7] : memref<32x32xf32, #tpu.memory_space<vmem>>, vector<32x32xf32>
    %cst_8 = arith.constant dense<0.000000e+00> : vector<2x32xf32>
    %9 = tpu.matmul %7, %8, %cst_8 {dimension_numbers = #tpu.dot_dimension_numbers<[1], [0], [0], [1], [0, 0, 1, 1], [], []>} : vector<2x32xf32>, vector<32x32xf32>, vector<2x32xf32> -> vector<2x32xf32>
    %c0_9 = arith.constant 0 : index
    %c0_10 = arith.constant 0 : index
    %10 = vector.load %arg5[%c0_9, %c0_10] : memref<1x32xf32, #tpu.memory_space<vmem>>, vector<1x32xf32>
    %11 = vector.broadcast %10 : vector<1x32xf32> to vector<2x32xf32>
    %12 = arith.addf %9, %11 : vector<2x32xf32>
    %cst_11 = arith.constant 0.000000e+00 : f32
    %13 = vector.broadcast %cst_11 : f32 to vector<2x32xf32>
    %14 = arith.maximumf %12, %13 : vector<2x32xf32>
    %c0_12 = arith.constant 0 : index
    %c0_13 = arith.constant 0 : index
    %15 = vector.load %arg6[%c0_12, %c0_13] : memref<32x8xf32, #tpu.memory_space<vmem>>, vector<32x8xf32>
    %cst_14 = arith.constant dense<0.000000e+00> : vector<2x8xf32>
    %16 = tpu.matmul %14, %15, %cst_14 {dimension_numbers = #tpu.dot_dimension_numbers<[1], [0], [0], [1], [0, 0, 1, 1], [], []>} : vector<2x32xf32>, vector<32x8xf32>, vector<2x8xf32> -> vector<2x8xf32>
    %c0_15 = arith.constant 0 : index
    %c0_16 = arith.constant 0 : index
    %17 = vector.load %arg7[%c0_15, %c0_16] : memref<1x8xf32, #tpu.memory_space<vmem>>, vector<1x8xf32>
    %18 = vector.broadcast %17 : vector<1x8xf32> to vector<2x8xf32>
    %19 = arith.addf %16, %18 : vector<2x8xf32>
    %20 = math.tanh %19 : vector<2x8xf32>
    %c0_17 = arith.constant 0 : index
    %c0_18 = arith.constant 0 : index
    %21 = vector.load %arg8[%c0_17, %c0_18] : memref<2x8xf32, #tpu.memory_space<vmem>>, vector<2x8xf32>
    tpu.vector_store %arg8[%c0_17, %c0_18], %20 {strides = array<i32>} : memref<2x8xf32, #tpu.memory_space<vmem>>, vector<2x8xf32>,
    return
  }
  func.func @transform_0(%arg0: i32) -> (i32, i32) {
    %c0_i32 = arith.constant 0 : i32
    %c0_i32_0 = arith.constant 0 : i32
    return %arg0, %c0_i32 : i32, i32
  }
  func.func @transform_1(%arg0: i32) -> (i32, i32) {
    %c0_i32 = arith.constant 0 : i32
    %c0_i32_0 = arith.constant 0 : i32
    %c0_i32_1 = arith.constant 0 : i32
    return %c0_i32, %c0_i32_0 : i32, i32
  }
  func.func @transform_2(%arg0: i32) -> (i32, i32) {
    %c0_i32 = arith.constant 0 : i32
    %c0_i32_0 = arith.constant 0 : i32
    %c0_i32_1 = arith.constant 0 : i32
    return %c0_i32, %c0_i32_0 : i32, i32
  }
  func.func @transform_3(%arg0: i32) -> (i32, i32) {
    %c0_i32 = arith.constant 0 : i32
    %c0_i32_0 = arith.constant 0 : i32
    %c0_i32_1 = arith.constant 0 : i32
    return %c0_i32, %c0_i32_0 : i32, i32
  }
  func.func @transform_4(%arg0: i32) -> (i32, i32) {
    %c0_i32 = arith.constant 0 : i32
    %c0_i32_0 = arith.constant 0 : i32
    %c0_i32_1 = arith.constant 0 : i32
    return %c0_i32, %c0_i32_0 : i32, i32
  }
  func.func @transform_5(%arg0: i32) -> (i32, i32) {
    %c0_i32 = arith.constant 0 : i32
    %c0_i32_0 = arith.constant 0 : i32
    %c0_i32_1 = arith.constant 0 : i32
    return %c0_i32, %c0_i32_0 : i32, i32
  }
  func.func @transform_6(%arg0: i32) -> (i32, i32) {
    %c0_i32 = arith.constant 0 : i32
    %c0_i32_0 = arith.constant 0 : i32
    %c0_i32_1 = arith.constant 0 : i32
    return %c0_i32, %c0_i32_0 : i32, i32
  }
  func.func @transform_7(%arg0: i32) -> (i32, i32) {
    %c0_i32 = arith.constant 0 : i32
    %c0_i32_0 = arith.constant 0 : i32
    return %arg0, %c0_i32 : i32, i32
  }
}

</mosaic_0001>

<llo_original>
// kernel: tpu_custom_call.1
$region0: #{tpu_custom_call.1}
  #allocation0 [shape = 'u32[]', space=smem, size = 0x4, offset = 0x4, fixed_abs, tag = 'smem constant byte address 0x4 - core index']
  #allocation1 [shape = 'u32[72,128]{1,0:T(1,128)}', space=vmem, size = 0x9000, scoped, tag = 'internal scratch']
  %s0 = inlined_call_operand.vmem [shape: f32[2,16], index: 0, kind: input, shape index: {}]
  %s1 = inlined_call_operand.hbm [shape: f32[16,32], index: 1, kind: input, shape index: {}]
  %s2 = inlined_call_operand.vmem [shape: f32[1,32], index: 2, kind: input, shape index: {}]
  %s3 = inlined_call_operand.vmem [shape: f32[32,32], index: 3, kind: input, shape index: {}]
  %s4 = inlined_call_operand.vmem [shape: f32[1,32], index: 4, kind: input, shape index: {}]
  %s5 = inlined_call_operand.vmem [shape: f32[32,8], index: 5, kind: input, shape index: {}]
  %s6 = inlined_call_operand.vmem [shape: f32[1,8], index: 6, kind: input, shape index: {}]
  %s7 = inlined_call_operand.hbm [shape: f32[2,8], index: 7, kind: output, shape index: {}]
  %s8 = sld [smem:[#allocation0]]
  $region42: #{tpu_custom_call.1} parent=0
    _
  %s10 = ssub.s32 1, %s8
  %s11 = scalar_select 0, %s10, %s8
  $region1: #{tpu_custom_call.1} parent=0
    #allocation2 [shape = 'u8[8192]{0}', space=vmem, size = 0x2000, scoped, tag = 'input window, operand 1, single buffered']
    #allocation3 [shape = 's32[1]{0}', space=sflag, size = 0x4, scoped, tag = 'scoped memory for tpu_custom_call.1']
    #allocation4 [shape = 's32[1]{0}', space=sflag, size = 0x4, scoped, tag = 'scoped memory for tpu_custom_call.1']
    #allocation5 [shape = 'u8[1024]{0}', space=vmem, size = 0x400, scoped, tag = 'output window, operand 0, single buffered']
    %12 = vsyncpa [#allocation3], 0
    %13 = vsyncpa [#allocation4], 0
    // Predicated region
    $region2: #{tpu_custom_call.1} parent=1 // pred_check
      _
    $region3: #{tpu_custom_call.1} parent=1 // pred_check_branch
      %15 = sbr.rel (0) target = $region5
    $region4: #{tpu_custom_call.1} parent=1 // pred_region
      _
    $region5: #{tpu_custom_call.1} parent=1 // pred_fallthru
      _
    // Predicated region
    $region6: #{tpu_custom_call.1} parent=1 // pred_check
      _
    $region7: #{tpu_custom_call.1} parent=1 // pred_check_branch
      %17 = sbr.rel (0) target = $region9
    $region8: #{tpu_custom_call.1} parent=1 // pred_region
      %19 = vsyncadd [#allocation3], 0
      %s20 = sshll.u32 %s1, 4
      %s21 = int_to_ptr.hbm [resolvable:$true] %s20
      %s22 = sshll.u32 [#allocation2], 4
      %s23 = int_to_ptr.vmem [resolvable:$true] %s22
      %28 = dma.hbm_to_vmem [thread:$0]  %s21, 256, %s23, [#allocation3], 128, 128, 8
    $region9: #{tpu_custom_call.1} parent=1 // pred_fallthru
      _
    // Predicated region
    $region10: #{tpu_custom_call.1} parent=1 // pred_check
      _
    $region11: #{tpu_custom_call.1} parent=1 // pred_check_branch
      %30 = sbr.rel (0) target = $region13
    $region12: #{tpu_custom_call.1} parent=1 // pred_region
      _
    $region13: #{tpu_custom_call.1} parent=1 // pred_fallthru
      _
    // Predicated region
    $region14: #{tpu_custom_call.1} parent=1 // pred_check
      _
    $region15: #{tpu_custom_call.1} parent=1 // pred_check_branch
      %32 = sbr.rel (0) target = $region17
    $region16: #{tpu_custom_call.1} parent=1 // pred_region
      _
    $region17: #{tpu_custom_call.1} parent=1 // pred_fallthru
      _
    // Predicated region
    $region18: #{tpu_custom_call.1} parent=1 // pred_check
      _
    $region19: #{tpu_custom_call.1} parent=1 // pred_check_branch
      %34 = sbr.rel (0) target = $region21
    $region20: #{tpu_custom_call.1} parent=1 // pred_region
      _
    $region21: #{tpu_custom_call.1} parent=1 // pred_fallthru
      _
    // Predicated region
    $region22: #{tpu_custom_call.1} parent=1 // pred_check
      _
    $region23: #{tpu_custom_call.1} parent=1 // pred_check_branch
      %36 = sbr.rel (0) target = $region25
    $region24: #{tpu_custom_call.1} parent=1 // pred_region
      _
    $region25: #{tpu_custom_call.1} parent=1 // pred_fallthru
      _
    // Predicated region
    $region26: #{tpu_custom_call.1} parent=1 // pred_check
      _
    $region27: #{tpu_custom_call.1} parent=1 // pred_check_branch
      %38 = sbr.rel (0) target = $region29
    $region28: #{tpu_custom_call.1} parent=1 // pred_region
      _
    $region29: #{tpu_custom_call.1} parent=1 // pred_fallthru
      _
    // Predicated region
    $region30: #{tpu_custom_call.1} parent=1 // pred_check
      _
    $region31: #{tpu_custom_call.1} parent=1 // pred_check_branch
      %40 = sbr.rel (0) target = $region33
    $region32: #{tpu_custom_call.1} parent=1 // pred_region
      %42 = dma.done [#allocation3], 256
    $region33: #{tpu_custom_call.1} parent=1 // pred_fallthru
      _
    %v43 = vld [vmem:[%s0] sm:$0x3]
    %v44 = vld [vmem:[#allocation2] sm:$0xff]
    %v45 = vld [vmem:[#allocation2 + $0x8] sm:$0xff]
    %v46 = vld [vmem:[%s2] sm:$0x1]
    %v48 = vperm.slane %v46, 0
    %vm50 = vcmask 130048
    %v52 = vsel %vm50, %v43, 0
    %54 = vmatpush.msra.mxu0 0.0
    %55 = vmatpush.msra.mxu0 0.0
    %56 = vmatpush.msra.mxu0 0.0
    %57 = vmatpush.msra.mxu0 0.0
    %58 = vmatpush.msra.mxu0 0.0
    %59 = vmatpush.msra.mxu0 0.0
    %60 = vmatpush.msra.mxu0 0.0
    %61 = vmatpush.msra.mxu0 0.0
    %62 = vmatpush.msra.mxu0 0.0
    %63 = vmatpush.msra.mxu0 0.0
    %64 = vmatpush.msra.mxu0 0.0
    %65 = vmatpush.msra.mxu0 0.0
    %66 = vmatpush.msra.mxu0 0.0
    %67 = vmatpush.msra.mxu0 0.0
    %68 = vmatpush.msra.mxu0 %v45
    %69 = vmatpush.msra.mxu0 %v44
    %70 = vmatmul.f32.gmra.mxu0 %v52
    %v71 = vpop.f32.mrf.mxu0
    %v72 = vadd.f32 %v48, %v71
    %73 = vdwg.mxu0
    %v74 = vmax.f32 %v72, 0.0
    %v75 = vld [vmem:[%s3] sm:$0xff]
    %v76 = vld [vmem:[%s3 + $0x8] sm:$0xff]
    %v77 = vld [vmem:[%s3 + $0x10] sm:$0xff]
    %v78 = vld [vmem:[%s3 + $0x18] sm:$0xff]
    %v79 = vld [vmem:[%s4] sm:$0x1]
    %v81 = vperm.slane %v79, 0
    %vm83 = vcmask 261120
    %v85 = vsel %vm83, %v74, 0
    %87 = vmatpush.msra.mxu0 0.0
    %88 = vmatpush.msra.mxu0 0.0
    %89 = vmatpush.msra.mxu0 0.0
    %90 = vmatpush.msra.mxu0 0.0
    %91 = vmatpush.msra.mxu0 0.0
    %92 = vmatpush.msra.mxu0 0.0
    %93 = vmatpush.msra.mxu0 0.0
    %94 = vmatpush.msra.mxu0 0.0
    %95 = vmatpush.msra.mxu0 0.0
    %96 = vmatpush.msra.mxu0 0.0
    %97 = vmatpush.msra.mxu0 0.0
    %98 = vmatpush.msra.mxu0 0.0
    %99 = vmatpush.msra.mxu0 %v78
    %100 = vmatpush.msra.mxu0 %v77
    %101 = vmatpush.msra.mxu0 %v76
    %102 = vmatpush.msra.mxu0 %v75
    %103 = vmatmul.f32.gmra.mxu0 %v85
    %v104 = vpop.f32.mrf.mxu0
    %v105 = vadd.f32 %v81, %v104
    %106 = vdwg.mxu0
    %v107 = vmax.f32 %v105, 0.0
    %v108 = vld [vmem:[%s5] sm:$0xff]
    %v109 = vld [vmem:[%s5 + $0x8] sm:$0xff]
    %v110 = vld [vmem:[%s5 + $0x10] sm:$0xff]
    %v111 = vld [vmem:[%s5 + $0x18] sm:$0xff]
    %v112 = vld [vmem:[%s6] sm:$0x1]
    %v114 = vperm.slane %v112, 0
    %v117 = vsel %vm83, %v107, 0
    %119 = vmatpush.msra.mxu0 0.0
    %120 = vmatpush.msra.mxu0 0.0
    %121 = vmatpush.msra.mxu0 0.0
    %122 = vmatpush.msra.mxu0 0.0
    %123 = vmatpush.msra.mxu0 0.0
    %124 = vmatpush.msra.mxu0 0.0
    %125 = vmatpush.msra.mxu0 0.0
    %126 = vmatpush.msra.mxu0 0.0
    %127 = vmatpush.msra.mxu0 0.0
    %128 = vmatpush.msra.mxu0 0.0
    %129 = vmatpush.msra.mxu0 0.0
    %130 = vmatpush.msra.mxu0 0.0
    %131 = vmatpush.msra.mxu0 %v111
    %132 = vmatpush.msra.mxu0 %v110
    %133 = vmatpush.msra.mxu0 %v109
    %134 = vmatpush.msra.mxu0 %v108
    %135 = vmatmul.f32.gmra.mxu0 %v117
    %v136 = vpop.f32.mrf.mxu0
    %v137 = vadd.f32 %v114, %v136
    %138 = vdwg.mxu0
    %v139 = vtanh.pop %v137
    %vm140 = vcmask 58368
    %141 = vst.msk [vmem:[#allocation5] sm:$0x3] %vm140, %v139
    // Predicated region
    $region34: #{tpu_custom_call.1} parent=1 // pred_check
      _
    $region35: #{tpu_custom_call.1} parent=1 // pred_check_branch
      %143 = sbr.rel (0) target = $region37
    $region36: #{tpu_custom_call.1} parent=1 // pred_region
      %145 = vsyncadd [#allocation4], 0
      %s147 = sshll.u32 [#allocation5], 4
      %s148 = int_to_ptr.vmem [resolvable:$true] %s147
      %s149 = sshll.u32 %s7, 4
      %s150 = int_to_ptr.hbm [resolvable:$true] %s149
      %152 = dma.vmem_to_hbm [thread:$0]  %s148, 32, %s150, [#allocation4]
    $region37: #{tpu_custom_call.1} parent=1 // pred_fallthru
      _
    // Predicated region
    $region38: #{tpu_custom_call.1} parent=1 // pred_check
      _
    $region39: #{tpu_custom_call.1} parent=1 // pred_check_branch
      %154 = sbr.rel (0) target = $region41
    $region40: #{tpu_custom_call.1} parent=1 // pred_region
      %156 = dma.done [#allocation4], 32
    $region41: #{tpu_custom_call.1} parent=1 // pred_fallthru
      _
    %157 = vsyncpa [#allocation3], 1
    %158 = vsyncpa [#allocation4], 1

</llo_original>
